<compile_context>
chip_gen: v5e
topology: v5e:2x2
jax: 0.10.0
libtpu: 0.0.40
codegen_flags: <defaults>
</compile_context>

<pallas_src>
import functools

import jax
import jax.numpy as jnp
from jax.experimental import pallas as pl
from jax.experimental.pallas import tpu as pltpu


_LANE = 128          # TPU vreg lane width (minor-dim block granularity)
_TILE_B_CAP = 8192   # rows per grid step; ~1 MiB of double-buffered I/O blocks


# --------------------------------------------------------------------------- #
# Kernel
# --------------------------------------------------------------------------- #
def _make_actor_kernel(n_linear: int, action_dim: int):
    """Full MLP on a transposed (feature, tile_b) block.

    Writes one merged (2*action_dim, tile_b) lane-dense output where rows
    >= action_dim already hold std = exp(clamp(logStd, -10, 1)).
    """

    def kernel(*refs):
        # refs = [state_t, w0, b0, ..., w_{n-1}, b_{n-1}, out]
        x_ref = refs[0]
        param_refs = refs[1:1 + 2 * n_linear]
        out_ref = refs[-1]

        x = x_ref[...]                               # (state_dim, tile_b) f32
        for i in range(n_linear):
            w = param_refs[2 * i][...]               # (fan_out, fan_in) f32
            b = param_refs[2 * i + 1][...]           # (fan_out, 1)      f32
            # f32 MXU matmul with f32 accumulation; batch stays on lanes.
            x = jnp.dot(w, x, preferred_element_type=jnp.float32) + b
            if i < n_linear - 1:
                # LeakyReLU(negative_slope=0.01)
                x = jnp.where(x > 0, x, 0.01 * x)

        # Merged output: rows [0, A) = mu, rows [A, 2A) = std.
        row = jax.lax.broadcasted_iota(jnp.int32, x.shape, dimension=0)
        # clip BEFORE exp (also keeps padded rows of a ragged last tile finite)
        std_all = jnp.exp(jnp.clip(x, -10.0, 1.0))
        out_ref[...] = jnp.where(row >= action_dim, std_all, x).astype(out_ref.dtype)

    return kernel


# --------------------------------------------------------------------------- #
# Parameters (pre-laid-out for the kernel, once, host side)
# --------------------------------------------------------------------------- #
def init_actor_params(key, state_dim, action_dim, hidden_dim, num_hidden_layers):
    """nn.Linear-equivalent init. Returns a flat tuple (w0, b0, w1, b1, ...)
    with w kept in its native (fan_out, fan_in) layout and b reshaped to
    (fan_out, 1); everything float32 (consumed by the kernel as-is)."""
    layers_dim = [state_dim] + [hidden_dim] * num_hidden_layers + [2 * action_dim]
    params = []
    for i in range(len(layers_dim) - 1):
        fan_in, fan_out = layers_dim[i], layers_dim[i + 1]
        key, wk, bk = jax.random.split(key, 3)
        bound = 1.0 / (fan_in ** 0.5)
        w = jax.random.uniform(wk, (fan_out, fan_in), jnp.float32, -bound, bound)
        b = jax.random.uniform(bk, (fan_out,), jnp.float32, -bound, bound)
        params.append(w)                   # (fan_out, fan_in): used directly
        params.append(b.reshape(-1, 1))    # (fan_out, 1): broadcasts over lanes
    return tuple(params)


# --------------------------------------------------------------------------- #
# Tile selection
# --------------------------------------------------------------------------- #
def _round_up(x: int, m: int) -> int:
    return -(-x // m) * m


def _pick_tile_b(batch: int) -> int:
    """Rows per grid step.

    - Small batches: one step (grid=1). Per-step overhead (~0.35 us) dominates
      this tiny MLP, and v5e/v6e have a single TensorCore anyway.
    - Large batches: cap at _TILE_B_CAP but keep >= 2 "parallel" steps so both
      v7x TensorCores get work; tiles are lane-aligned (multiple of 128).
    """
    if batch <= 1024:
        return batch
    target_steps = max(2, pl.cdiv(batch, _TILE_B_CAP))
    tile = _round_up(pl.cdiv(batch, target_steps), _LANE)
    tile = min(tile, _TILE_B_CAP)
    return batch if tile >= batch else tile


def _normalize_tile_b(batch: int, tile_b) -> int:
    """Validate a user-supplied tile_b against the lane (128) constraint."""
    if tile_b is None:
        return _pick_tile_b(batch)
    tile_b = min(int(tile_b), batch)
    if tile_b < batch:
        # Batch lives on the lane (minor) axis of every block.
        tile_b = min(_round_up(tile_b, _LANE), batch)
    return tile_b


# --------------------------------------------------------------------------- #
# Forward wrapper
# --------------------------------------------------------------------------- #
def _batch_tiled_spec(block_shape):
    # Helper (no late-binding closure issues).
    return pl.BlockSpec(block_shape, lambda i: (0, i))


def _resident_spec(shape):
    nd = len(shape)
    return pl.BlockSpec(shape, lambda i, _nd=nd: (0,) * _nd)


@functools.partial(jax.jit, static_argnames=("action_dim", "tile_b"))
def actor_forward(state, params_flat, action_dim, tile_b=None):
    """Runs the Pallas kernel. Returns (mu, std), each (B, action_dim) f32."""
    batch, state_dim = state.shape
    n_linear = len(params_flat) // 2
    out_dim = 2 * action_dim

    tile_b = _normalize_tile_b(batch, tile_b)
    grid = (pl.cdiv(batch, tile_b),)

    # Batch on the lane axis: one cheap XLA transpose in, one out.
    state_t = jnp.transpose(state).astype(jnp.float32)      # (state_dim, B)

    in_specs = [_batch_tiled_spec((state_dim, tile_b))]
    for p in params_flat:
        in_specs.append(_resident_spec(p.shape))   # VMEM-resident across steps

    kernel = _make_actor_kernel(n_linear, action_dim)

    out_t = pl.pallas_call(
        kernel,
        grid=grid,
        in_specs=in_specs,
        out_specs=_batch_tiled_spec((out_dim, tile_b)),
        out_shape=jax.ShapeDtypeStruct((out_dim, batch), jnp.float32),
        compiler_params=pltpu.CompilerParams(
            dimension_semantics=("parallel",)),   # shards steps over v7x's 2 TCs
    )(state_t, *params_flat)

    # Free XLA slices/transposes in the wrapper (kernel stores lane-dense).
    mu = jnp.transpose(out_t[:action_dim, :])
    std = jnp.transpose(out_t[action_dim:, :])
    return mu, std


# --------------------------------------------------------------------------- #
# Pure-JAX reference (PyTorch forward semantics, f32)
# --------------------------------------------------------------------------- #
def _reference_forward(state, params_flat, action_dim):
    x = state.astype(jnp.float32)
    n_linear = len(params_flat) // 2
    for i in range(n_linear):
        w, b = params_flat[2 * i], params_flat[2 * i + 1]   # (out,in), (out,1)
        x = jnp.dot(x, w.T, precision=jax.lax.Precision.HIGHEST) + b[:, 0]
        if i < n_linear - 1:
            x = jnp.where(x > 0, x, 0.01 * x)
    mu, log_std = x[:, :action_dim], x[:, action_dim:]
    return mu, jnp.exp(jnp.clip(log_std, -10.0, 1.0))


# --------------------------------------------------------------------------- #
# Self-test
# --------------------------------------------------------------------------- #
if __name__ == "__main__":
    # Small SAC-like sizes.
    state_dim, action_dim, hidden_dim, num_hidden_layers = 8, 4, 32, 2
    batch = 8

    key = jax.random.PRNGKey(0)
    key, sk = jax.random.split(key)
    state = jax.random.normal(sk, (batch, state_dim), dtype=jnp.float32)

    params = init_actor_params(
        key, state_dim, action_dim, hidden_dim, num_hidden_layers)

    # Single-step (grid=1) path.
    mu, std = actor_forward(state, params, action_dim)
    jax.block_until_ready((mu, std))

    assert mu.shape == (batch, action_dim) and std.shape == (batch, action_dim)

    mu_ref, std_ref = _reference_forward(state, params, action_dim)
    assert jnp.allclose(mu, mu_ref, atol=1e-3, rtol=1e-3), \
        float(jnp.max(jnp.abs(mu - mu_ref)))
    assert jnp.allclose(std, std_ref, atol=1e-3, rtol=1e-3), \
        float(jnp.max(jnp.abs(std - std_ref)))
    assert bool(jnp.all(std > 0))

    # Also exercise the batch-tiled multi-step ("parallel") path once.
    big_batch = 4096
    key, sk2 = jax.random.split(key)
    state_big = jax.random.normal(sk2, (big_batch, state_dim), dtype=jnp.float32)
    mu_b, std_b = actor_forward(state_big, params, action_dim)   # -> 2 steps
    jax.block_until_ready((mu_b, std_b))
    mu_bref, std_bref = _reference_forward(state_big, params, action_dim)
    assert jnp.allclose(mu_b, mu_bref, atol=1e-3, rtol=1e-3)
    assert jnp.allclose(std_b, std_bref, atol=1e-3, rtol=1e-3)
    assert bool(jnp.all(std_b > 0))

    print("KERNEL_OK")
</pallas_src>

<mosaic_0001>
module attributes {stable_mosaic.version = 11 : i64} {
  func.func @kernel(%arg0: i32, %arg1: memref<8x8xf32, #tpu.memory_space<vmem>>, %arg2: memref<32x8xf32, #tpu.memory_space<vmem>>, %arg3: memref<32x1xf32, #tpu.memory_space<vmem>>, %arg4: memref<32x32xf32, #tpu.memory_space<vmem>>, %arg5: memref<32x1xf32, #tpu.memory_space<vmem>>, %arg6: memref<8x32xf32, #tpu.memory_space<vmem>>, %arg7: memref<8x1xf32, #tpu.memory_space<vmem>>, %arg8: memref<8x8xf32, #tpu.memory_space<vmem>>) attributes {dimension_semantics = [#tpu.dimension_semantics<parallel>], iteration_bounds = array<i64: 1>, scalar_prefetch = 0 : i64, scratch_operands = 0 : i64, tpu.core_type = #tpu.core_type<tc>, window_params = [{transform_indices = @transform_0, window_bounds = array<i64: 8, 8>}, {pipeline_mode = #tpu.pipeline_mode<synchronous>, transform_indices = @transform_1, window_bounds = array<i64: 32, 8>}, {pipeline_mode = #tpu.pipeline_mode<synchronous>, transform_indices = @transform_2, window_bounds = array<i64: 32, 1>}, {pipeline_mode = #tpu.pipeline_mode<synchronous>, transform_indices = @transform_3, window_bounds = array<i64: 32, 32>}, {pipeline_mode = #tpu.pipeline_mode<synchronous>, transform_indices = @transform_4, window_bounds = array<i64: 32, 1>}, {pipeline_mode = #tpu.pipeline_mode<synchronous>, transform_indices = @transform_5, window_bounds = array<i64: 8, 32>}, {pipeline_mode = #tpu.pipeline_mode<synchronous>, transform_indices = @transform_6, window_bounds = array<i64: 8, 1>}, {transform_indices = @transform_7, window_bounds = array<i64: 8, 8>}]} {
    %c0 = arith.constant 0 : index
    %c0_0 = arith.constant 0 : index
    %0 = vector.load %arg1[%c0, %c0_0] : memref<8x8xf32, #tpu.memory_space<vmem>>, vector<8x8xf32>
    %c0_1 = arith.constant 0 : index
    %c0_2 = arith.constant 0 : index
    %1 = vector.load %arg2[%c0_1, %c0_2] : memref<32x8xf32, #tpu.memory_space<vmem>>, vector<32x8xf32>
    %c0_3 = arith.constant 0 : index
    %c0_4 = arith.constant 0 : index
    %2 = vector.load %arg3[%c0_3, %c0_4] : memref<32x1xf32, #tpu.memory_space<vmem>>, vector<32x1xf32>
    %cst = arith.constant dense<0.000000e+00> : vector<32x8xf32>
    %3 = tpu.matmul %1, %0, %cst {dimension_numbers = #tpu.dot_dimension_numbers<[1], [0], [0], [1], [0, 0, 1, 1], [], []>} : vector<32x8xf32>, vector<8x8xf32>, vector<32x8xf32> -> vector<32x8xf32>
    %4 = vector.broadcast %2 : vector<32x1xf32> to vector<32x8xf32>
    %5 = arith.addf %3, %4 : vector<32x8xf32>
    %cst_5 = arith.constant 0.000000e+00 : f32
    %6 = vector.broadcast %cst_5 : f32 to vector<32x8xf32>
    %7 = arith.cmpf ogt, %5, %6 : vector<32x8xf32>
    %cst_6 = arith.constant 0.00999999977 : f32
    %8 = vector.broadcast %cst_6 : f32 to vector<32x8xf32>
    %9 = arith.mulf %8, %5 : vector<32x8xf32>
    %10 = arith.select %7, %5, %9 : vector<32x8xi1>, vector<32x8xf32>
    %c0_7 = arith.constant 0 : index
    %c0_8 = arith.constant 0 : index
    %11 = vector.load %arg4[%c0_7, %c0_8] : memref<32x32xf32, #tpu.memory_space<vmem>>, vector<32x32xf32>
    %c0_9 = arith.constant 0 : index
    %c0_10 = arith.constant 0 : index
    %12 = vector.load %arg5[%c0_9, %c0_10] : memref<32x1xf32, #tpu.memory_space<vmem>>, vector<32x1xf32>
    %cst_11 = arith.constant dense<0.000000e+00> : vector<32x8xf32>
    %13 = tpu.matmul %11, %10, %cst_11 {dimension_numbers = #tpu.dot_dimension_numbers<[1], [0], [0], [1], [0, 0, 1, 1], [], []>} : vector<32x32xf32>, vector<32x8xf32>, vector<32x8xf32> -> vector<32x8xf32>
    %14 = vector.broadcast %12 : vector<32x1xf32> to vector<32x8xf32>
    %15 = arith.addf %13, %14 : vector<32x8xf32>
    %cst_12 = arith.constant 0.000000e+00 : f32
    %16 = vector.broadcast %cst_12 : f32 to vector<32x8xf32>
    %17 = arith.cmpf ogt, %15, %16 : vector<32x8xf32>
    %cst_13 = arith.constant 0.00999999977 : f32
    %18 = vector.broadcast %cst_13 : f32 to vector<32x8xf32>
    %19 = arith.mulf %18, %15 : vector<32x8xf32>
    %20 = arith.select %17, %15, %19 : vector<32x8xi1>, vector<32x8xf32>
    %c0_14 = arith.constant 0 : index
    %c0_15 = arith.constant 0 : index
    %21 = vector.load %arg6[%c0_14, %c0_15] : memref<8x32xf32, #tpu.memory_space<vmem>>, vector<8x32xf32>
    %c0_16 = arith.constant 0 : index
    %c0_17 = arith.constant 0 : index
    %22 = vector.load %arg7[%c0_16, %c0_17] : memref<8x1xf32, #tpu.memory_space<vmem>>, vector<8x1xf32>
    %cst_18 = arith.constant dense<0.000000e+00> : vector<8x8xf32>
    %23 = tpu.matmul %21, %20, %cst_18 {dimension_numbers = #tpu.dot_dimension_numbers<[1], [0], [0], [1], [0, 0, 1, 1], [], []>} : vector<8x32xf32>, vector<32x8xf32>, vector<8x8xf32> -> vector<8x8xf32>
    %24 = vector.broadcast %22 : vector<8x1xf32> to vector<8x8xf32>
    %25 = arith.addf %23, %24 : vector<8x8xf32>
    %26 = tpu.iota {dimensions = array<i32: 0>} : vector<8x8xi32>
    %cst_19 = arith.constant -1.000000e+01 : f32
    %cst_20 = arith.constant 1.000000e+00 : f32
    %27 = vector.broadcast %cst_19 : f32 to vector<8x8xf32>
    %28 = arith.maximumf %27, %25 : vector<8x8xf32>
    %29 = vector.broadcast %cst_20 : f32 to vector<8x8xf32>
    %30 = arith.minimumf %29, %28 : vector<8x8xf32>
    %31 = math.exp %30 : vector<8x8xf32>
    %c4_i32 = arith.constant 4 : i32
    %32 = vector.broadcast %c4_i32 : i32 to vector<8x8xi32>
    %33 = arith.cmpi sge, %26, %32 : vector<8x8xi32>
    %34 = arith.select %33, %31, %25 : vector<8x8xi1>, vector<8x8xf32>
    %c0_21 = arith.constant 0 : index
    %c0_22 = arith.constant 0 : index
    %35 = vector.load %arg8[%c0_21, %c0_22] : memref<8x8xf32, #tpu.memory_space<vmem>>, vector<8x8xf32>
    tpu.vector_store %arg8[%c0_21, %c0_22], %34 {strides = array<i32>} : memref<8x8xf32, #tpu.memory_space<vmem>>, vector<8x8xf32>,
    return
  }
  func.func @transform_0(%arg0: i32) -> (i32, i32) {
    %c0_i32 = arith.constant 0 : i32
    %c0_i32_0 = arith.constant 0 : i32
    return %c0_i32, %arg0 : i32, i32
  }
  func.func @transform_1(%arg0: i32) -> (i32, i32) {
    %c0_i32 = arith.constant 0 : i32
    %c0_i32_0 = arith.constant 0 : i32
    %c0_i32_1 = arith.constant 0 : i32
    return %c0_i32, %c0_i32_0 : i32, i32
  }
  func.func @transform_2(%arg0: i32) -> (i32, i32) {
    %c0_i32 = arith.constant 0 : i32
    %c0_i32_0 = arith.constant 0 : i32
    %c0_i32_1 = arith.constant 0 : i32
    return %c0_i32, %c0_i32_0 : i32, i32
  }
  func.func @transform_3(%arg0: i32) -> (i32, i32) {
    %c0_i32 = arith.constant 0 : i32
    %c0_i32_0 = arith.constant 0 : i32
    %c0_i32_1 = arith.constant 0 : i32
    return %c0_i32, %c0_i32_0 : i32, i32
  }
  func.func @transform_4(%arg0: i32) -> (i32, i32) {
    %c0_i32 = arith.constant 0 : i32
    %c0_i32_0 = arith.constant 0 : i32
    %c0_i32_1 = arith.constant 0 : i32
    return %c0_i32, %c0_i32_0 : i32, i32
  }
  func.func @transform_5(%arg0: i32) -> (i32, i32) {
    %c0_i32 = arith.constant 0 : i32
    %c0_i32_0 = arith.constant 0 : i32
    %c0_i32_1 = arith.constant 0 : i32
    return %c0_i32, %c0_i32_0 : i32, i32
  }
  func.func @transform_6(%arg0: i32) -> (i32, i32) {
    %c0_i32 = arith.constant 0 : i32
    %c0_i32_0 = arith.constant 0 : i32
    %c0_i32_1 = arith.constant 0 : i32
    return %c0_i32, %c0_i32_0 : i32, i32
  }
  func.func @transform_7(%arg0: i32) -> (i32, i32) {
    %c0_i32 = arith.constant 0 : i32
    %c0_i32_0 = arith.constant 0 : i32
    return %c0_i32, %arg0 : i32, i32
  }
}

</mosaic_0001>

<llo_original>
// kernel: actor_forward.1
$region0: #{actor_forward.1}
  #allocation0 [shape = 'u32[]', space=smem, size = 0x4, offset = 0x4, fixed_abs, tag = 'smem constant byte address 0x4 - core index']
  #allocation1 [shape = 'u32[72,128]{1,0:T(1,128)}', space=vmem, size = 0x9000, scoped, tag = 'internal scratch']
  %s0 = inlined_call_operand.vmem [shape: f32[8,8], index: 0, kind: input, shape index: {}]
  %s1 = inlined_call_operand.vmem [shape: f32[32,8], index: 1, kind: input, shape index: {}]
  %s2 = inlined_call_operand.vmem [shape: f32[32,1], index: 2, kind: input, shape index: {}]
  %s3 = inlined_call_operand.vmem [shape: f32[32,32], index: 3, kind: input, shape index: {}]
  %s4 = inlined_call_operand.vmem [shape: f32[32,1], index: 4, kind: input, shape index: {}]
  %s5 = inlined_call_operand.vmem [shape: f32[8,32], index: 5, kind: input, shape index: {}]
  %s6 = inlined_call_operand.vmem [shape: f32[8,1], index: 6, kind: input, shape index: {}]
  %s7 = inlined_call_operand.vmem [shape: f32[8,8], index: 7, kind: output, shape index: {}]
  %s8 = sld [smem:[#allocation0]]
  $region38: #{actor_forward.1} parent=0
    _
  %s10 = ssub.s32 1, %s8
  %s11 = scalar_select 0, %s10, %s8
  // Predicated region
  $region2: #{actor_forward.1} parent=0 // pred_check
    _
  $region3: #{actor_forward.1} parent=0 // pred_check_branch
    %13 = sbr.rel (0) target = $region5
  $region4: #{actor_forward.1} parent=0 // pred_region
    _
  $region5: #{actor_forward.1} parent=0 // pred_fallthru
    _
  // Predicated region
  $region6: #{actor_forward.1} parent=0 // pred_check
    _
  $region7: #{actor_forward.1} parent=0 // pred_check_branch
    %15 = sbr.rel (0) target = $region9
  $region8: #{actor_forward.1} parent=0 // pred_region
    _
  $region9: #{actor_forward.1} parent=0 // pred_fallthru
    _
  // Predicated region
  $region10: #{actor_forward.1} parent=0 // pred_check
    _
  $region11: #{actor_forward.1} parent=0 // pred_check_branch
    %17 = sbr.rel (0) target = $region13
  $region12: #{actor_forward.1} parent=0 // pred_region
    _
  $region13: #{actor_forward.1} parent=0 // pred_fallthru
    _
  // Predicated region
  $region14: #{actor_forward.1} parent=0 // pred_check
    _
  $region15: #{actor_forward.1} parent=0 // pred_check_branch
    %19 = sbr.rel (0) target = $region17
  $region16: #{actor_forward.1} parent=0 // pred_region
    _
  $region17: #{actor_forward.1} parent=0 // pred_fallthru
    _
  // Predicated region
  $region18: #{actor_forward.1} parent=0 // pred_check
    _
  $region19: #{actor_forward.1} parent=0 // pred_check_branch
    %21 = sbr.rel (0) target = $region21
  $region20: #{actor_forward.1} parent=0 // pred_region
    _
  $region21: #{actor_forward.1} parent=0 // pred_fallthru
    _
  // Predicated region
  $region22: #{actor_forward.1} parent=0 // pred_check
    _
  $region23: #{actor_forward.1} parent=0 // pred_check_branch
    %23 = sbr.rel (0) target = $region25
  $region24: #{actor_forward.1} parent=0 // pred_region
    _
  $region25: #{actor_forward.1} parent=0 // pred_fallthru
    _
  // Predicated region
  $region26: #{actor_forward.1} parent=0 // pred_check
    _
  $region27: #{actor_forward.1} parent=0 // pred_check_branch
    %25 = sbr.rel (0) target = $region29
  $region28: #{actor_forward.1} parent=0 // pred_region
    _
  $region29: #{actor_forward.1} parent=0 // pred_fallthru
    _
  %v26 = vld [vmem:[%s0] sm:$0xff]
  %v27 = vld [vmem:[%s1] sm:$0xff]
  %v28 = vld [vmem:[%s1 + $0x8] sm:$0xff]
  %v29 = vld [vmem:[%s1 + $0x10] sm:$0xff]
  %v30 = vld [vmem:[%s1 + $0x18] sm:$0xff]
  %v31 = vld [vmem:[%s2] sm:$0xff]
  %v32 = vld [vmem:[%s2 + $0x8] sm:$0xff]
  %v33 = vld [vmem:[%s2 + $0x10] sm:$0xff]
  %v34 = vld [vmem:[%s2 + $0x18] sm:$0xff]
  %36 = vset.pattern.permute.xlu0 0
  %37 = vperm.xlu0 %36, %v31
  %v38 = vpop.permute.xlu0 %37
  %41 = vset.pattern.permute.xlu0 0
  %42 = vperm.xlu0 %41, %v32
  %v43 = vpop.permute.xlu0 %42
  %46 = vset.pattern.permute.xlu0 0
  %47 = vperm.xlu0 %46, %v33
  %v48 = vpop.permute.xlu0 %47
  %51 = vset.pattern.permute.xlu0 0
  %52 = vperm.xlu0 %51, %v34
  %v53 = vpop.permute.xlu0 %52
  %vm55 = vcmask 64512
  %v57 = vsel %vm55, %v27, 0
  %v60 = vsel %vm55, %v28, 0
  %v63 = vsel %vm55, %v29, 0
  %v66 = vsel %vm55, %v30, 0
  %68 = vmatpush.msra.mxu0 0.0
  %69 = vmatpush.msra.mxu0 0.0
  %70 = vmatpush.msra.mxu0 0.0
  %71 = vmatpush.msra.mxu0 0.0
  %72 = vmatpush.msra.mxu0 0.0
  %73 = vmatpush.msra.mxu0 0.0
  %74 = vmatpush.msra.mxu0 0.0
  %75 = vmatpush.msra.mxu0 0.0
  %76 = vmatpush.msra.mxu0 0.0
  %77 = vmatpush.msra.mxu0 0.0
  %78 = vmatpush.msra.mxu0 0.0
  %79 = vmatpush.msra.mxu0 0.0
  %80 = vmatpush.msra.mxu0 0.0
  %81 = vmatpush.msra.mxu0 0.0
  %82 = vmatpush.msra.mxu0 0.0
  %83 = vmatpush.msra.mxu0 %v26
  %84 = vmatmul.f32.gmra.mxu0 %v57
  %v85 = vpop.f32.mrf.mxu0
  %v86 = vadd.f32 %v38, %v85
  %87 = vmatmul.f32.gmra.mxu0 %v60
  %v88 = vpop.f32.mrf.mxu0
  %v89 = vadd.f32 %v43, %v88
  %90 = vmatmul.f32.gmra.mxu0 %v63
  %v91 = vpop.f32.mrf.mxu0
  %v92 = vadd.f32 %v48, %v91
  %93 = vmatmul.f32.gmra.mxu0 %v66
  %v94 = vpop.f32.mrf.mxu0
  %v95 = vadd.f32 %v53, %v94
  %96 = vdwg.mxu0
  %vm97 = vcmp.gt.f32.partialorder %v86, 0.0
  %vm98 = vcmp.gt.f32.partialorder %v89, 0.0
  %vm99 = vcmp.gt.f32.partialorder %v92, 0.0
  %vm100 = vcmp.gt.f32.partialorder %v95, 0.0
  %v101 = vmul.f32 %v86, 0.01
  %v102 = vmul.f32 %v89, 0.01
  %v103 = vmul.f32 %v92, 0.01
  %v104 = vmul.f32 %v95, 0.01
  %v105 = vsel %vm97, %v86, %v101
  %v106 = vsel %vm98, %v89, %v102
  %v107 = vsel %vm99, %v92, %v103
  %v108 = vsel %vm100, %v95, %v104
  %v109 = vld [vmem:[%s3] sm:$0xff]
  %v110 = vld [vmem:[%s3 + $0x8] sm:$0xff]
  %v111 = vld [vmem:[%s3 + $0x10] sm:$0xff]
  %v112 = vld [vmem:[%s3 + $0x18] sm:$0xff]
  %v113 = vld [vmem:[%s4] sm:$0xff]
  %v114 = vld [vmem:[%s4 + $0x8] sm:$0xff]
  %v115 = vld [vmem:[%s4 + $0x10] sm:$0xff]
  %v116 = vld [vmem:[%s4 + $0x18] sm:$0xff]
  %118 = vset.pattern.permute.xlu0 0
  %119 = vperm.xlu0 %118, %v113
  %v120 = vpop.permute.xlu0 %119
  %123 = vset.pattern.permute.xlu0 0
  %124 = vperm.xlu0 %123, %v114
  %v125 = vpop.permute.xlu0 %124
  %128 = vset.pattern.permute.xlu0 0
  %129 = vperm.xlu0 %128, %v115
  %v130 = vpop.permute.xlu0 %129
  %133 = vset.pattern.permute.xlu0 0
  %134 = vperm.xlu0 %133, %v116
  %v135 = vpop.permute.xlu0 %134
  %vm137 = vcmask 261120
  %v139 = vsel %vm137, %v109, 0
  %v142 = vsel %vm137, %v110, 0
  %v145 = vsel %vm137, %v111, 0
  %v148 = vsel %vm137, %v112, 0
  %150 = vmatpush.msra.mxu0 0.0
  %151 = vmatpush.msra.mxu0 0.0
  %152 = vmatpush.msra.mxu0 0.0
  %153 = vmatpush.msra.mxu0 0.0
  %154 = vmatpush.msra.mxu0 0.0
  %155 = vmatpush.msra.mxu0 0.0
  %156 = vmatpush.msra.mxu0 0.0
  %157 = vmatpush.msra.mxu0 0.0
  %158 = vmatpush.msra.mxu0 0.0
  %159 = vmatpush.msra.mxu0 0.0
  %160 = vmatpush.msra.mxu0 0.0
  %161 = vmatpush.msra.mxu0 0.0
  %162 = vmatpush.msra.mxu0 %v108
  %163 = vmatpush.msra.mxu0 %v107
  %164 = vmatpush.msra.mxu0 %v106
  %165 = vmatpush.msra.mxu0 %v105
  %166 = vmatmul.f32.gmra.mxu0 %v139
  %v167 = vpop.f32.mrf.mxu0
  %v168 = vadd.f32 %v120, %v167
  %169 = vmatmul.f32.gmra.mxu0 %v142
  %v170 = vpop.f32.mrf.mxu0
  %v171 = vadd.f32 %v125, %v170
  %172 = vmatmul.f32.gmra.mxu0 %v145
  %v173 = vpop.f32.mrf.mxu0
  %v174 = vadd.f32 %v130, %v173
  %175 = vmatmul.f32.gmra.mxu0 %v148
  %v176 = vpop.f32.mrf.mxu0
  %v177 = vadd.f32 %v135, %v176
  %178 = vdwg.mxu0
  %vm179 = vcmp.gt.f32.partialorder %v168, 0.0
  %vm180 = vcmp.gt.f32.partialorder %v171, 0.0
  %vm181 = vcmp.gt.f32.partialorder %v174, 0.0
  %vm182 = vcmp.gt.f32.partialorder %v177, 0.0
  %v183 = vmul.f32 %v168, 0.01
  %v184 = vmul.f32 %v171, 0.01
  %v185 = vmul.f32 %v174, 0.01
  %v186 = vmul.f32 %v177, 0.01
  %v187 = vsel %vm179, %v168, %v183
  %v188 = vsel %vm180, %v171, %v184
  %v189 = vsel %vm181, %v174, %v185
  %v190 = vsel %vm182, %v177, %v186
  %v191 = vld [vmem:[%s5] sm:$0xff]
  %v192 = vld [vmem:[%s6] sm:$0xff]
  %194 = vset.pattern.permute.xlu0 0
  %195 = vperm.xlu0 %194, %v192
  %v196 = vpop.permute.xlu0 %195
  %v199 = vsel %vm137, %v191, 0
  %201 = vmatpush.msra.mxu0 0.0
  %202 = vmatpush.msra.mxu0 0.0
  %203 = vmatpush.msra.mxu0 0.0
  %204 = vmatpush.msra.mxu0 0.0
  %205 = vmatpush.msra.mxu0 0.0
  %206 = vmatpush.msra.mxu0 0.0
  %207 = vmatpush.msra.mxu0 0.0
  %208 = vmatpush.msra.mxu0 0.0
  %209 = vmatpush.msra.mxu0 0.0
  %210 = vmatpush.msra.mxu0 0.0
  %211 = vmatpush.msra.mxu0 0.0
  %212 = vmatpush.msra.mxu0 0.0
  %213 = vmatpush.msra.mxu0 %v190
  %214 = vmatpush.msra.mxu0 %v189
  %215 = vmatpush.msra.mxu0 %v188
  %216 = vmatpush.msra.mxu0 %v187
  %217 = vmatmul.f32.gmra.mxu0 %v199
  %v218 = vpop.f32.mrf.mxu0
  %v219 = vadd.f32 %v196, %v218
  %220 = vdwg.mxu0
  %v221 = vlaneseq
  %v222 = vshrl.u32 %v221, 7
  %v223 = vmax.f32 %v219, -10.0
  %v224 = vmin.f32 %v223, 1.0
  %v225 = vmul.f32 %v224, 1.442695
  %v226 = vpow.pop %v225
  %vm227 = vcmp.ge.s32.totalorder %v222, 4
  %v228 = vsel %vm227, %v226, %v219
  %229 = vst.msk [vmem:[%s7] sm:$0xff] %vm55, %v228
  // Predicated region
  $region30: #{actor_forward.1} parent=0 // pred_check
    _
  $region31: #{actor_forward.1} parent=0 // pred_check_branch
    %231 = sbr.rel (0) target = $region33
  $region32: #{actor_forward.1} parent=0 // pred_region
    _
  $region33: #{actor_forward.1} parent=0 // pred_fallthru
    _
  // Predicated region
  $region34: #{actor_forward.1} parent=0 // pred_check
    _
  $region35: #{actor_forward.1} parent=0 // pred_check_branch
    %233 = sbr.rel (0) target = $region37
  $region36: #{actor_forward.1} parent=0 // pred_region
    _
  $region37: #{actor_forward.1} parent=0 // pred_fallthru
    _

</llo_original>
